<compile_context>
chip_gen: v5e
topology: v5e:2x2
jax: 0.10.0
libtpu: 0.0.40
codegen_flags: <defaults>
</compile_context>

<pallas_src>
import jax
import jax.numpy as jnp
from jax.experimental import pallas as pl
from jax.experimental.pallas import tpu as pltpu

_LANE_CHOICES = (512, 256, 128)       # lane-dense widths (multiples of 128 -> unmasked vst)
_TARGET_BLOCK_BYTES = 4 << 20         # ~4 MiB per buffer (amortizes per-step overhead on v7x)
_VMEM_LIMIT_BYTES = 32 << 20          # 3 arrays * 2 pipeline buffers * 4 MiB = 24 MiB live
_SUBLANE_PACK = {4: 8, 2: 16, 1: 32}  # f32 / bf16 / int8 sublane packing


def _add_kernel(x0_ref, x1_ref, o_ref):
    # Pure VPU elementwise add on the current (block_rows, lanes) tile.
    # NOTE: on a partial last grid step the trailing rows of the input tiles
    # hold unspecified values; that is correct for a pure elementwise op
    # because Pallas masks the out-of-bounds portion of the output writeback.
    # Any future non-elementwise change (reduction, NaN-sensitive op) must
    # mask those rows explicitly.
    o_ref[...] = x0_ref[...] + x1_ref[...]


def _choose_block_rows(rows: int, lanes: int, itemsize: int) -> int:
    """Pick a block row count sized in bytes, rounded to the dtype sublane pack."""
    pack = _SUBLANE_PACK.get(itemsize, 8)
    bytes_per_row = lanes * itemsize
    target_rows = max(pack, (_TARGET_BLOCK_BYTES // bytes_per_row) // pack * pack)
    if rows > target_rows:
        return target_rows
    if rows >= 2 * pack:
        # One tile would cover everything -> split into >= 2 grid steps so
        # dimension_semantics=("parallel",) can engage both v7x TensorCores.
        half = pl.cdiv(pl.cdiv(rows, 2), pack) * pack
        return min(half, rows)
    return rows  # full-extent single block (always layout-legal)


def _skip_layer_pallas(x0: jax.Array, x1: jax.Array, lanes: int,
                       *, donate_x0: bool = False) -> jax.Array:
    orig_shape = x0.shape
    total = x0.size
    itemsize = jnp.dtype(x0.dtype).itemsize

    rows = total // lanes
    # Contiguous reshapes: bitcasts in XLA, no extra HBM traffic (no pad/slice).
    x0f = x0.reshape(rows, lanes)
    x1f = x1.reshape(rows, lanes)

    block_rows = _choose_block_rows(rows, lanes, itemsize)
    grid = (pl.cdiv(rows, block_rows),)
    spec = pl.BlockSpec((block_rows, lanes), lambda i: (i, 0))

    out_flat = pl.pallas_call(
        _add_kernel,
        out_shape=jax.ShapeDtypeStruct((rows, lanes), x0.dtype),
        grid=grid,
        in_specs=[spec, spec],
        out_specs=spec,
        compiler_params=pltpu.CompilerParams(
            dimension_semantics=("parallel",),
            vmem_limit_bytes=_VMEM_LIMIT_BYTES,
        ),
        cost_estimate=pl.CostEstimate(
            flops=total,
            transcendentals=0,
            bytes_accessed=3 * total * itemsize,
        ),
        input_output_aliases=({0: 0} if donate_x0 else {}),
    )(x0f, x1f)

    return out_flat.reshape(orig_shape)


def skip_layer(x0: jax.Array, x1: jax.Array, *,
               min_pallas_elems: int = 1 << 21,
               donate_x0: bool = False) -> jax.Array:
    """Pallas implementation of SkipLayer.forward: out = x0 + x1.

    A standalone elementwise add can at best tie a fused XLA add at the HBM
    roofline, so by default the Pallas path is used only for multi-MiB skip
    activations whose add cannot be fused elsewhere; small or ragged tensors
    take the plain XLA add.
    """
    assert x0.shape == x1.shape, "SkipLayer expects identically shaped inputs"
    assert x0.dtype == x1.dtype
    total = x0.size
    if total < min_pallas_elems:
        return x0 + x1
    lanes = next((l for l in _LANE_CHOICES if total % l == 0), None)
    if lanes is None:
        # Ragged total: padding would roughly triple HBM traffic, so the plain
        # XLA add is strictly better here.
        return x0 + x1
    return _skip_layer_pallas(x0, x1, lanes, donate_x0=donate_x0)


if __name__ == "__main__":
    key = jax.random.PRNGKey(0)
    k0, k1, k2, k3, k4, k5, k6, k7 = jax.random.split(key, 8)

    # Case 1: small NCHW skip shape (2048 elems -> lanes=512, rows=4, single
    # full-extent block).  min_pallas_elems=0 forces the Pallas path.
    shape1 = (2, 4, 16, 16)
    a0 = jax.random.normal(k0, shape1, dtype=jnp.float32)
    a1 = jax.random.normal(k1, shape1, dtype=jnp.float32)
    out1 = skip_layer(a0, a1, min_pallas_elems=0)
    jax.block_until_ready(out1)
    assert out1.shape == shape1 and out1.dtype == a0.dtype
    assert jnp.allclose(out1, a0 + a1), "Pallas SkipLayer mismatch (case 1)"

    # Case 2: multi-step grid with a partial last block.
    # 2*8*80*80 = 102400 elems -> rows=200, block_rows=104 -> grid=2, last
    # block has only 96 valid rows (exercises the masked-remainder path).
    shape2 = (2, 8, 80, 80)
    b0 = jax.random.normal(k2, shape2, dtype=jnp.float32)
    b1 = jax.random.normal(k3, shape2, dtype=jnp.float32)
    out2 = skip_layer(b0, b1, min_pallas_elems=0)
    jax.block_until_ready(out2)
    assert jnp.allclose(out2, b0 + b1), "Pallas SkipLayer mismatch (case 2)"

    # Case 3: bf16 dtype (exercises dtype-aware sublane packing and a 2-step
    # grid: 16384 elems -> rows=32, pack=16, block_rows=16).
    shape3 = (2, 8, 32, 32)
    c0 = jax.random.normal(k4, shape3, dtype=jnp.bfloat16)
    c1 = jax.random.normal(k5, shape3, dtype=jnp.bfloat16)
    out3 = skip_layer(c0, c1, min_pallas_elems=0)
    jax.block_until_ready(out3)
    assert jnp.allclose(out3.astype(jnp.float32),
                        (c0 + c1).astype(jnp.float32)), "Pallas SkipLayer mismatch (case 3)"

    # Case 4: ragged total (1155 elems, not divisible by 128) -> dispatcher
    # falls back to the plain XLA add (no pad/slice copies).
    shape4 = (3, 5, 7, 11)
    d0 = jax.random.normal(k6, shape4, dtype=jnp.float32)
    d1 = jax.random.normal(k7, shape4, dtype=jnp.float32)
    out4 = skip_layer(d0, d1, min_pallas_elems=0)
    jax.block_until_ready(out4)
    assert jnp.allclose(out4, d0 + d1), "SkipLayer fallback mismatch (case 4)"

    print("KERNEL_OK")
</pallas_src>

<mosaic_0001>
module attributes {stable_mosaic.version = 11 : i64} {
  func.func @_add_kernel(%arg0: i32, %arg1: memref<4x512xf32, #tpu.memory_space<vmem>>, %arg2: memref<4x512xf32, #tpu.memory_space<vmem>>, %arg3: memref<4x512xf32, #tpu.memory_space<vmem>>) attributes {dimension_semantics = [#tpu.dimension_semantics<parallel>], iteration_bounds = array<i64: 1>, scalar_prefetch = 0 : i64, scratch_operands = 0 : i64, tpu.core_type = #tpu.core_type<tc>, window_params = [{transform_indices = @transform_0, window_bounds = array<i64: 4, 512>}, {transform_indices = @transform_1, window_bounds = array<i64: 4, 512>}, {transform_indices = @transform_2, window_bounds = array<i64: 4, 512>}]} {
    %c0 = arith.constant 0 : index
    %c0_0 = arith.constant 0 : index
    %0 = vector.load %arg1[%c0, %c0_0] : memref<4x512xf32, #tpu.memory_space<vmem>>, vector<4x512xf32>
    %c0_1 = arith.constant 0 : index
    %c0_2 = arith.constant 0 : index
    %1 = vector.load %arg2[%c0_1, %c0_2] : memref<4x512xf32, #tpu.memory_space<vmem>>, vector<4x512xf32>
    %2 = arith.addf %0, %1 : vector<4x512xf32>
    %c0_3 = arith.constant 0 : index
    %c0_4 = arith.constant 0 : index
    %3 = vector.load %arg3[%c0_3, %c0_4] : memref<4x512xf32, #tpu.memory_space<vmem>>, vector<4x512xf32>
    tpu.vector_store %arg3[%c0_3, %c0_4], %2 {strides = array<i32>} : memref<4x512xf32, #tpu.memory_space<vmem>>, vector<4x512xf32>,
    return
  }
  func.func @transform_0(%arg0: i32) -> (i32, i32) {
    %c0_i32 = arith.constant 0 : i32
    %c0_i32_0 = arith.constant 0 : i32
    return %arg0, %c0_i32 : i32, i32
  }
  func.func @transform_1(%arg0: i32) -> (i32, i32) {
    %c0_i32 = arith.constant 0 : i32
    %c0_i32_0 = arith.constant 0 : i32
    return %arg0, %c0_i32 : i32, i32
  }
  func.func @transform_2(%arg0: i32) -> (i32, i32) {
    %c0_i32 = arith.constant 0 : i32
    %c0_i32_0 = arith.constant 0 : i32
    return %arg0, %c0_i32 : i32, i32
  }
}

</mosaic_0001>

<llo_original>
// kernel: tpu_custom_call.1
$region0: #{tpu_custom_call.1}
  #allocation0 [shape = 'u32[]', space=smem, size = 0x4, offset = 0x4, fixed_abs, tag = 'smem constant byte address 0x4 - core index']
  #allocation1 [shape = 'u32[72,128]{1,0:T(1,128)}', space=vmem, size = 0x9000, scoped, tag = 'internal scratch']
  %s0 = inlined_call_operand.hbm [shape: f32[4,512], index: 0, kind: input, shape index: {}]
  %s1 = inlined_call_operand.hbm [shape: f32[4,512], index: 1, kind: input, shape index: {}]
  %s2 = inlined_call_operand.hbm [shape: f32[4,512], index: 2, kind: output, shape index: {}]
  %s3 = sld [smem:[#allocation0]]
  $region26: #{tpu_custom_call.1} parent=0
    _
  %s5 = ssub.s32 1, %s3
  %s6 = scalar_select 0, %s5, %s3
  $region1: #{tpu_custom_call.1} parent=0
    #allocation2 [shape = 'u8[8192]{0}', space=vmem, size = 0x2000, scoped, tag = 'input window, operand 0, single buffered']
    #allocation3 [shape = 's32[1]{0}', space=sflag, size = 0x4, scoped, tag = 'scoped memory for tpu_custom_call.1']
    #allocation4 [shape = 's32[1]{0}', space=sflag, size = 0x4, scoped, tag = 'scoped memory for tpu_custom_call.1']
    #allocation5 [shape = 'u8[8192]{0}', space=vmem, size = 0x2000, scoped, tag = 'input window, operand 1, single buffered']
    #allocation6 [shape = 's32[1]{0}', space=sflag, size = 0x4, scoped, tag = 'scoped memory for tpu_custom_call.1']
    #allocation7 [shape = 'u8[8192]{0}', space=vmem, size = 0x2000, scoped, tag = 'output window, operand 0, single buffered']
    %7 = vsyncpa [#allocation3], 0
    %8 = vsyncpa [#allocation6], 0
    %9 = vsyncpa [#allocation4], 0
    // Predicated region
    $region2: #{tpu_custom_call.1} parent=1 // pred_check
      _
    $region3: #{tpu_custom_call.1} parent=1 // pred_check_branch
      %11 = sbr.rel (0) target = $region5
    $region4: #{tpu_custom_call.1} parent=1 // pred_region
      %13 = vsyncadd [#allocation3], 0
      %s15 = sshll.u32 %s0, 4
      %s16 = int_to_ptr.hbm [resolvable:$true] %s15
      %s17 = sshll.u32 [#allocation2], 4
      %s18 = int_to_ptr.vmem [resolvable:$true] %s17
      %20 = dma.hbm_to_vmem [thread:$0]  %s16, 256, %s18, [#allocation3]
    $region5: #{tpu_custom_call.1} parent=1 // pred_fallthru
      _
    // Predicated region
    $region6: #{tpu_custom_call.1} parent=1 // pred_check
      _
    $region7: #{tpu_custom_call.1} parent=1 // pred_check_branch
      %22 = sbr.rel (0) target = $region9
    $region8: #{tpu_custom_call.1} parent=1 // pred_region
      %24 = vsyncadd [#allocation6], 0
      %s26 = sshll.u32 %s1, 4
      %s27 = int_to_ptr.hbm [resolvable:$true] %s26
      %s28 = sshll.u32 [#allocation5], 4
      %s29 = int_to_ptr.vmem [resolvable:$true] %s28
      %31 = dma.hbm_to_vmem [thread:$0]  %s27, 256, %s29, [#allocation6]
    $region9: #{tpu_custom_call.1} parent=1 // pred_fallthru
      _
    // Predicated region
    $region10: #{tpu_custom_call.1} parent=1 // pred_check
      _
    $region11: #{tpu_custom_call.1} parent=1 // pred_check_branch
      %33 = sbr.rel (0) target = $region13
    $region12: #{tpu_custom_call.1} parent=1 // pred_region
      %35 = dma.done [#allocation3], 256
    $region13: #{tpu_custom_call.1} parent=1 // pred_fallthru
      _
    // Predicated region
    $region14: #{tpu_custom_call.1} parent=1 // pred_check
      _
    $region15: #{tpu_custom_call.1} parent=1 // pred_check_branch
      %37 = sbr.rel (0) target = $region17
    $region16: #{tpu_custom_call.1} parent=1 // pred_region
      %39 = dma.done [#allocation6], 256
    $region17: #{tpu_custom_call.1} parent=1 // pred_fallthru
      _
    %v40 = vld [vmem:[#allocation2] sm:$0xff]
    %v41 = vld [vmem:[#allocation2 + $0x8] sm:$0xff]
    %v42 = vld [vmem:[#allocation5] sm:$0xff]
    %v43 = vld [vmem:[#allocation5 + $0x8] sm:$0xff]
    %v44 = vadd.f32 %v40, %v42
    %v45 = vadd.f32 %v41, %v43
    %46 = vst [vmem:[#allocation7] sm:$0xff] %v44
    %47 = vst [vmem:[#allocation7 + $0x8] sm:$0xff] %v45
    // Predicated region
    $region18: #{tpu_custom_call.1} parent=1 // pred_check
      _
    $region19: #{tpu_custom_call.1} parent=1 // pred_check_branch
      %49 = sbr.rel (0) target = $region21
    $region20: #{tpu_custom_call.1} parent=1 // pred_region
      %51 = vsyncadd [#allocation4], 0
      %s53 = sshll.u32 [#allocation7], 4
      %s54 = int_to_ptr.vmem [resolvable:$true] %s53
      %s55 = sshll.u32 %s2, 4
      %s56 = int_to_ptr.hbm [resolvable:$true] %s55
      %58 = dma.vmem_to_hbm [thread:$0]  %s54, 256, %s56, [#allocation4]
    $region21: #{tpu_custom_call.1} parent=1 // pred_fallthru
      _
    // Predicated region
    $region22: #{tpu_custom_call.1} parent=1 // pred_check
      _
    $region23: #{tpu_custom_call.1} parent=1 // pred_check_branch
      %60 = sbr.rel (0) target = $region25
    $region24: #{tpu_custom_call.1} parent=1 // pred_region
      %62 = dma.done [#allocation4], 256
    $region25: #{tpu_custom_call.1} parent=1 // pred_fallthru
      _
    %63 = vsyncpa [#allocation3], 1
    %64 = vsyncpa [#allocation6], 1
    %65 = vsyncpa [#allocation4], 1

</llo_original>
